<compile_context>
chip_gen: v7x
topology: tpu7x:2x2x1
jax: 0.10.0
libtpu: 0.0.40
codegen_flags: <defaults>
</compile_context>

<pallas_src>
import functools

import jax
import jax.numpy as jnp
from jax.experimental import pallas as pl
from jax.experimental.pallas import tpu as pltpu


def _round_up(x, m):
    return ((x + m - 1) // m) * m


def _vmem_capacity_bytes():
    try:
        return pltpu.get_tpu_info().vmem_capacity_bytes
    except Exception:
        return 64 * 1024 * 1024          # conservative default (v7x per-TC VMEM)


def _epilogue(y, nw_ref, nb_ref, *, apply_norm, d_real, d_pad, eps):
    """Optional fused norm (MyViT semantics: unbiased std, eps added to std)."""
    if not apply_norm:
        return y
    if d_pad == d_real:
        # Lane-exact embed dim: no mask / iota needed.
        mean = jnp.mean(y, axis=-1, keepdims=True)
        centered = y - mean
    else:
        # Padded embed lanes must not contribute to the statistics; (1, Dp) mask row,
        # broadcasting handles the rest.
        mask = (jax.lax.broadcasted_iota(jnp.int32, (1, d_pad), 1)
                < d_real).astype(jnp.float32)
        ym = y * mask
        mean = jnp.sum(ym, axis=-1, keepdims=True) / jnp.float32(d_real)
        centered = (ym - mean) * mask
    denom = jnp.float32(max(d_real - 1, 1))         # unbiased (ddof=1); guard d_real==1
    var = jnp.sum(centered * centered, axis=-1, keepdims=True) / denom
    inv = pl.reciprocal(jnp.sqrt(var) + jnp.float32(eps), approx=False)
    w = nw_ref[...].astype(jnp.float32)
    b = nb_ref[...].astype(jnp.float32)
    return w * centered * inv + b


def _pe_kernel_single(lhs_ref, w_ref, b_ref, *rest,
                      apply_norm, d_real, d_pad, eps):
    """One grid step = one row tile. Full-K weight stays resident in VMEM."""
    if apply_norm:
        nw_ref, nb_ref, o_ref = rest
    else:
        (o_ref,) = rest
        nw_ref = nb_ref = None
    y = jnp.dot(lhs_ref[...], w_ref[...], preferred_element_type=jnp.float32)
    y = y + b_ref[...].astype(jnp.float32)
    y = _epilogue(y, nw_ref, nb_ref, apply_norm=apply_norm,
                  d_real=d_real, d_pad=d_pad, eps=eps)
    o_ref[...] = y.astype(o_ref.dtype)


def _pe_kernel_ktiled(lhs_ref, w_ref, b_ref, *rest,
                      apply_norm, d_real, d_pad, eps):
    """Fallback when the full-K weight does not fit VMEM: K-tiled accumulation."""
    if apply_norm:
        nw_ref, nb_ref, o_ref, acc_ref = rest
    else:
        o_ref, acc_ref = rest
        nw_ref = nb_ref = None
    k = pl.program_id(1)

    @pl.when(k == 0)
    def _():
        acc_ref[...] = jnp.zeros_like(acc_ref)

    acc_ref[...] += jnp.dot(lhs_ref[...], w_ref[...],
                            preferred_element_type=jnp.float32)

    @pl.when(k == pl.num_programs(1) - 1)
    def _():
        y = acc_ref[...] + b_ref[...].astype(jnp.float32)
        y = _epilogue(y, nw_ref, nb_ref, apply_norm=apply_norm,
                      d_real=d_real, d_pad=d_pad, eps=eps)
        o_ref[...] = y.astype(o_ref.dtype)


def patch_embedding(x, proj_w, proj_b, norm_weight=None, norm_bias=None,
                    *, eps=1e-6, row_tile=None, compute_dtype=jnp.bfloat16,
                    _force_ktiled=False):
    """
    x:        (B, C, H, W)
    proj_w:   (embed_dim, C, P, P)   -- torch nn.Conv2d weight layout
    proj_b:   (embed_dim,)
    norm_weight / norm_bias: (embed_dim,) or None (Identity, the module default)
    Returns:  (B, num_patches, embed_dim) in x.dtype
    """
    B, C, H, W = x.shape
    D, Cw, P, P2 = proj_w.shape
    assert C == Cw and P == P2
    assert H % P == 0 and W % P == 0, "image size must be divisible by patch size"
    Gh, Gw = H // P, W // P
    num_patches = Gh * Gw
    N = B * num_patches
    K = C * P * P

    apply_norm = norm_weight is not None
    if apply_norm:
        assert norm_bias is not None

    out_dtype = x.dtype
    cdt = jnp.dtype(compute_dtype)

    # --- chip-dependent VMEM sizing ------------------------------------------
    cap = _vmem_capacity_bytes()
    if cap >= 100 * 1024 * 1024:        # v5e / v6e: 128 MiB VMEM
        budget = 80 * 1024 * 1024
        vmem_limit = 96 * 1024 * 1024
        default_row_tile = 1024
    else:                               # v7x: 64 MiB per TensorCore
        budget = 40 * 1024 * 1024
        vmem_limit = 48 * 1024 * 1024
        default_row_tile = 512
    if row_tile is None:
        row_tile = default_row_tile

    # --- patchify / im2col (layout only; bf16 halves the materialized bytes) --
    patches = (x.astype(cdt)
                 .reshape(B, C, Gh, P, Gw, P)
                 .transpose(0, 2, 4, 1, 3, 5)
                 .reshape(N, K))                       # row=(b,gh,gw), col=(c,ph,pw)
    w2 = proj_w.reshape(D, K).T.astype(cdt)            # (K, D), conv contraction order
    b2 = proj_b.astype(jnp.float32).reshape(1, D)
    vecs = []
    if apply_norm:
        vecs = [norm_weight.astype(jnp.float32).reshape(1, D),
                norm_bias.astype(jnp.float32).reshape(1, D)]

    # --- lane-dense padding (zeros are harmless for the matmul) ---------------
    Kp = _round_up(K, 128)
    Dp = _round_up(D, 128)

    csize = cdt.itemsize
    osize = jnp.dtype(out_dtype).itemsize
    vec_bytes = 2 * (1 + len(vecs)) * Dp * 4            # double-buffered f32 row vectors

    # Single-K path: resident (double-buffered) full-K weight, no accumulator.
    fixed_single = 2 * Kp * Dp * csize + vec_bytes
    per_row_single = 2 * Kp * csize + 2 * Dp * osize    # lhs dbuf + out dbuf
    single_k = (not _force_ktiled) and (fixed_single + 8 * per_row_single <= budget)

    if single_k:
        fixed, per_row = fixed_single, per_row_single
    else:
        tk = 128
        for cand in (512, 384, 256, 128):
            if Kp % cand == 0:
                tk = cand
                break
        fixed = 2 * tk * Dp * csize + vec_bytes
        per_row = 2 * tk * csize + 2 * Dp * osize + 4 * Dp   # + f32 accumulator

    tm_cap = max(8, ((budget - fixed) // per_row) // 8 * 8)
    n8 = _round_up(N, 8)
    tm = min(row_tile, tm_cap, n8)
    # Ensure >= 2 row tiles so both v7x TensorCores get work (cheap on 1-TC chips).
    if tm >= n8 and n8 >= 16:
        tm = _round_up(n8 // 2, 8)
    Np = _round_up(N, tm)

    patches = jnp.pad(patches, ((0, Np - N), (0, Kp - K)))
    w2 = jnp.pad(w2, ((0, Kp - K), (0, Dp - D)))
    b2 = jnp.pad(b2, ((0, 0), (0, Dp - D)))
    vecs = [jnp.pad(v, ((0, 0), (0, Dp - D))) for v in vecs]
    operands = [patches, w2, b2] + vecs

    if single_k:
        grid = (Np // tm,)
        in_specs = [pl.BlockSpec((tm, Kp), lambda i: (i, 0)),     # patch rows
                    pl.BlockSpec((Kp, Dp), lambda i: (0, 0)),     # weight (resident)
                    pl.BlockSpec((1, Dp), lambda i: (0, 0))]      # bias (resident)
        in_specs += [pl.BlockSpec((1, Dp), lambda i: (0, 0)) for _ in vecs]
        out_spec = pl.BlockSpec((tm, Dp), lambda i: (i, 0))
        scratch = []
        semantics = ("parallel",)
        kernel = functools.partial(_pe_kernel_single, apply_norm=apply_norm,
                                   d_real=D, d_pad=Dp, eps=eps)
    else:
        grid = (Np // tm, Kp // tk)          # K reduction innermost
        in_specs = [pl.BlockSpec((tm, tk), lambda i, k: (i, k)),
                    pl.BlockSpec((tk, Dp), lambda i, k: (k, 0)),
                    pl.BlockSpec((1, Dp), lambda i, k: (0, 0))]
        in_specs += [pl.BlockSpec((1, Dp), lambda i, k: (0, 0)) for _ in vecs]
        out_spec = pl.BlockSpec((tm, Dp), lambda i, k: (i, 0))
        scratch = [pltpu.VMEM((tm, Dp), jnp.float32)]
        semantics = ("parallel", "arbitrary")
        kernel = functools.partial(_pe_kernel_ktiled, apply_norm=apply_norm,
                                   d_real=D, d_pad=Dp, eps=eps)

    out = pl.pallas_call(
        kernel,
        out_shape=jax.ShapeDtypeStruct((Np, Dp), out_dtype),
        grid_spec=pltpu.PrefetchScalarGridSpec(
            num_scalar_prefetch=0,
            grid=grid,
            in_specs=in_specs,
            out_specs=out_spec,
            scratch_shapes=scratch,
        ),
        compiler_params=pltpu.CompilerParams(
            dimension_semantics=semantics,
            vmem_limit_bytes=vmem_limit,
            # Allow XLA to fuse the patchify/cast/pad producer into the input DMA
            # instead of materializing the (N, K) im2col buffer separately in HBM.
            allow_input_fusion=[True] + [False] * (len(operands) - 1),
        ),
    )(*operands)

    return out[:N, :D].reshape(B, num_patches, D)


if __name__ == "__main__":
    key = jax.random.PRNGKey(0)
    k1, k2, k3, k4, k5 = jax.random.split(key, 5)

    B, C, IMG, PATCH, EMBED = 2, 4, 16, 4, 32
    GH = GW = IMG // PATCH
    NPATCH = GH * GW

    x = jax.random.normal(k1, (B, C, IMG, IMG), dtype=jnp.float32)
    proj_w = 0.02 * jax.random.normal(k2, (EMBED, C, PATCH, PATCH), dtype=jnp.float32)
    proj_b = 0.01 * jax.random.normal(k3, (EMBED,), dtype=jnp.float32)
    norm_w = jnp.ones((EMBED,), dtype=jnp.float32)
    norm_b = jnp.zeros((EMBED,), dtype=jnp.float32)

    # Pure-JAX reference: strided VALID conv == Conv2d(kernel=patch, stride=patch).
    def conv_ref(xx, ww, bb, d):
        r = jax.lax.conv_general_dilated(
            xx, ww, window_strides=(PATCH, PATCH), padding="VALID",
            dimension_numbers=("NCHW", "OIHW", "NCHW"))
        r = r + bb.reshape(1, d, 1, 1)
        return r.reshape(B, d, NPATCH).transpose(0, 2, 1)          # (B, N, D)

    def norm_ref(p, w, b, d, eps=1e-6):
        mean = jnp.mean(p, axis=-1, keepdims=True)
        std = jnp.sqrt(jnp.sum((p - mean) ** 2, axis=-1, keepdims=True) / (d - 1))
        return w * (p - mean) / (std + eps) + b

    ref_proj = conv_ref(x, proj_w, proj_b, EMBED)

    # 1) Default module config: normlayer=None -> Identity.
    y_ident = patch_embedding(x, proj_w, proj_b)
    jax.block_until_ready(y_ident)
    assert y_ident.shape == (B, NPATCH, EMBED)
    assert jnp.allclose(y_ident, ref_proj, atol=1e-2, rtol=1e-2), "projection mismatch"

    # 2) Fused (MyViT-style) norm: unbiased std, eps added to std (single-K path).
    y_norm = patch_embedding(x, proj_w, proj_b, norm_w, norm_b, eps=1e-6)
    jax.block_until_ready(y_norm)
    ref_n = norm_ref(ref_proj, norm_w, norm_b, EMBED)
    assert jnp.allclose(y_norm, ref_n, atol=2e-2, rtol=2e-2), "norm mismatch"

    # 3) K-tiled fallback path (exercised explicitly for coverage).
    y_kt = patch_embedding(x, proj_w, proj_b, norm_w, norm_b, eps=1e-6,
                           _force_ktiled=True)
    jax.block_until_ready(y_kt)
    assert jnp.allclose(y_kt, ref_n, atol=2e-2, rtol=2e-2), "ktiled mismatch"

    # 4) Lane-exact embed dim (D == 128) to exercise the mask-free epilogue.
    D2 = 128
    proj_w2 = 0.02 * jax.random.normal(k4, (D2, C, PATCH, PATCH), dtype=jnp.float32)
    proj_b2 = 0.01 * jax.random.normal(k5, (D2,), dtype=jnp.float32)
    ref_proj2 = conv_ref(x, proj_w2, proj_b2, D2)
    ref_n2 = norm_ref(ref_proj2, jnp.ones((D2,), jnp.float32),
                      jnp.zeros((D2,), jnp.float32), D2)
    y2 = patch_embedding(x, proj_w2, proj_b2,
                         jnp.ones((D2,), jnp.float32), jnp.zeros((D2,), jnp.float32))
    jax.block_until_ready(y2)
    assert jnp.allclose(y2, ref_n2, atol=2e-2, rtol=2e-2), "D=128 norm mismatch"

    print("KERNEL_OK")
</pallas_src>

<mosaic_0001>
module attributes {stable_mosaic.version = 11 : i64} {
  func.func @_pe_kernel_single(%arg0: i32, %arg1: memref<16x128xbf16, #tpu.memory_space<vmem>>, %arg2: memref<128x128xbf16, #tpu.memory_space<vmem>>, %arg3: memref<1x128xf32, #tpu.memory_space<vmem>>, %arg4: memref<16x128xf32, #tpu.memory_space<vmem>>) attributes {dimension_semantics = [#tpu.dimension_semantics<parallel>], iteration_bounds = array<i64: 2>, scalar_prefetch = 0 : i64, scratch_operands = 0 : i64, tpu.core_type = #tpu.core_type<tc>, window_params = [{transform_indices = @transform_0, window_bounds = array<i64: 16, 128>}, {pipeline_mode = #tpu.pipeline_mode<synchronous>, transform_indices = @transform_1, window_bounds = array<i64: 128, 128>}, {pipeline_mode = #tpu.pipeline_mode<synchronous>, transform_indices = @transform_2, window_bounds = array<i64: 1, 128>}, {transform_indices = @transform_3, window_bounds = array<i64: 16, 128>}]} {
    %c0 = arith.constant 0 : index
    %c0_0 = arith.constant 0 : index
    %0 = vector.load %arg1[%c0, %c0_0] : memref<16x128xbf16, #tpu.memory_space<vmem>>, vector<16x128xbf16>
    %c0_1 = arith.constant 0 : index
    %c0_2 = arith.constant 0 : index
    %1 = vector.load %arg2[%c0_1, %c0_2] : memref<128x128xbf16, #tpu.memory_space<vmem>>, vector<128x128xbf16>
    %cst = arith.constant dense<0.000000e+00> : vector<16x128xf32>
    %2 = tpu.matmul %0, %1, %cst {dimension_numbers = #tpu.dot_dimension_numbers<[1], [0], [0], [1], [0, 0, 1, 1], [], []>} : vector<16x128xbf16>, vector<128x128xbf16>, vector<16x128xf32> -> vector<16x128xf32>
    %c0_3 = arith.constant 0 : index
    %c0_4 = arith.constant 0 : index
    %3 = vector.load %arg3[%c0_3, %c0_4] : memref<1x128xf32, #tpu.memory_space<vmem>>, vector<1x128xf32>
    %4 = vector.broadcast %3 : vector<1x128xf32> to vector<16x128xf32>
    %5 = arith.addf %2, %4 : vector<16x128xf32>
    %c0_5 = arith.constant 0 : index
    %c0_6 = arith.constant 0 : index
    %6 = vector.load %arg4[%c0_5, %c0_6] : memref<16x128xf32, #tpu.memory_space<vmem>>, vector<16x128xf32>
    tpu.vector_store %arg4[%c0_5, %c0_6], %5 {strides = array<i32>} : memref<16x128xf32, #tpu.memory_space<vmem>>, vector<16x128xf32>,
    return
  }
  func.func @transform_0(%arg0: i32) -> (i32, i32) {
    %c0_i32 = arith.constant 0 : i32
    %c0_i32_0 = arith.constant 0 : i32
    return %arg0, %c0_i32 : i32, i32
  }
  func.func @transform_1(%arg0: i32) -> (i32, i32) {
    %c0_i32 = arith.constant 0 : i32
    %c0_i32_0 = arith.constant 0 : i32
    %c0_i32_1 = arith.constant 0 : i32
    return %c0_i32, %c0_i32_0 : i32, i32
  }
  func.func @transform_2(%arg0: i32) -> (i32, i32) {
    %c0_i32 = arith.constant 0 : i32
    %c0_i32_0 = arith.constant 0 : i32
    %c0_i32_1 = arith.constant 0 : i32
    return %c0_i32, %c0_i32_0 : i32, i32
  }
  func.func @transform_3(%arg0: i32) -> (i32, i32) {
    %c0_i32 = arith.constant 0 : i32
    %c0_i32_0 = arith.constant 0 : i32
    return %arg0, %c0_i32 : i32, i32
  }
}

</mosaic_0001>

<llo_original>
// kernel: tpu_custom_call.1
$region0: #{tpu_custom_call.1}
  #allocation0 [shape = 'u32[]', space=smem, size = 0x4, offset = 0x4, fixed_abs, tag = 'smem constant byte address 0x4 - core index']
  #allocation1 [shape = 'u32[144,128]{1,0:T(1,128)}', space=vmem, size = 0x12000, scoped, tag = 'internal scratch']
  %s0 = inlined_call_operand.hbm [shape: bf16[32,128], index: 0, kind: input, shape index: {}]
  %s1 = inlined_call_operand.hbm [shape: bf16[128,128], index: 1, kind: input, shape index: {}]
  %s2 = inlined_call_operand.vmem [shape: f32[1,128], index: 2, kind: input, shape index: {}]
  %s3 = inlined_call_operand.hbm [shape: f32[32,128], index: 3, kind: output, shape index: {}]
  %s4 = sld [smem:[#allocation0]]
  $region53: #{tpu_custom_call.1} parent=0
    _
  %s6 = ssub.s32 1, %s4
  %s7 = scalar_select 0, %s6, %s4
  $region1: #{tpu_custom_call.1} parent=0
    #allocation2 [shape = 'u8[8192]{0}', space=vmem, size = 0x2000, scoped, tag = 'input window, operand 0']
    #allocation3 [shape = 's32[2]{0}', space=sflag, size = 0x8, scoped, tag = 'scoped memory for tpu_custom_call.1']
    #allocation4 [shape = 's32[2]{0}', space=sflag, size = 0x8, scoped, tag = 'scoped memory for tpu_custom_call.1']
    #allocation5 [shape = 'u8[32768]{0}', space=vmem, size = 0x8000, scoped, tag = 'input window, operand 1, single buffered']
    #allocation6 [shape = 's32[1]{0}', space=sflag, size = 0x4, scoped, tag = 'scoped memory for tpu_custom_call.1']
    #allocation7 [shape = 'u8[16384]{0}', space=vmem, size = 0x4000, scoped, tag = 'output window, operand 0']
    %8 = vsyncpa [#allocation3], 0
    %s9 = scalar_lea.sflag [#allocation3], 1
    %10 = vsyncpa %s9, 0
    %11 = vsyncpa [#allocation6], 0
    %12 = vsyncpa [#allocation4], 0
    %s13 = scalar_lea.sflag [#allocation4], 1
    %14 = vsyncpa %s13, 0
    loop: start=0, step=1, limit=4
    $region2: #{tpu_custom_call.1} parent=1 // loop_pre_header
      _
    $region3: #{tpu_custom_call.1} parent=1 // loop_header
      %s16 = sphi 0, %s20
      %p17 = scmp.ge.s32.totalorder %s16, 4
      %s26 = sphi 0, %s28
      %s29 = sphi 0, %s26
      %s30 = sphi 0, %s29
      %s46 = sphi 0, %s30
      %s50 = sphi 0, %s50
      %s52 = sphi 0, %s50
      %s53 = sphi 0, %s52
      %s67 = sphi 0, %s53
      %s71 = sphi 0, %s71
      %s73 = sphi 0, %s71
      %s74 = sphi 0, %s73
      %s88 = sphi 0, %s74
      %s94 = sphi 0, %s96
      %s97 = sphi 0, %s94
      %s98 = sphi 0, %s97
      %s114 = sphi 0, %s98
    $region4: #{tpu_custom_call.1} parent=1 // loop_header_branch
      %19 = sbr.rel (%p17) target = $region8
    $region5: #{tpu_custom_call.1} parent=1 // loop_body
      %s21 = ssub.s32 %s16, 1
      %s22 = ssub.s32 %s16, 2
      %s23 = sadd.s32 %s16, 1
      %s24 = ssub.s32 %s16, %s23
      %p25 = scmp.eq.s32.totalorder %s24, 0
      %s27 = sadd.s32 %s26, 1
      %s28 = scalar_select %p25, %s26, %s27
      %p31 = pneg %p25
      %p32 = scmp.eq.s32.totalorder %s16, 1
      %p33 = por %p31, %p32
      %p34 = scmp.ne.s32.totalorder %s26, %s29
      %p35 = scmp.eq.s32.totalorder %s16, 0
      %p36 = por %p34, %p35
      %p37 = scmp.ne.s32.totalorder %s26, %s29
      %p38 = scmp.eq.s32.totalorder %s21, 1
      %p39 = por %p37, %p38
      %p40 = scmp.ne.s32.totalorder %s29, %s30
      %p41 = scmp.eq.s32.totalorder %s21, 0
      %p42 = por %p40, %p41
      %p43 = scmp.ne.s32.totalorder %s29, %s30
      %p44 = scmp.eq.s32.totalorder %s22, 1
      %p45 = por %p43, %p44
      %p47 = scmp.ne.s32.totalorder %s30, %s46
      %p48 = scmp.eq.s32.totalorder %s22, 0
      %p49 = por %p47, %p48
      %s51 = sadd.s32 %s50, 1
      %p54 = scmp.eq.s32.totalorder %s16, 1
      %p55 = scmp.ne.s32.totalorder %s50, %s52
      %p56 = scmp.eq.s32.totalorder %s16, 0
      %p57 = por %p55, %p56
      %p58 = scmp.ne.s32.totalorder %s50, %s52
      %p59 = scmp.eq.s32.totalorder %s21, 1
      %p60 = por %p58, %p59
      %p61 = scmp.ne.s32.totalorder %s52, %s53
      %p62 = scmp.eq.s32.totalorder %s21, 0
      %p63 = por %p61, %p62
      %p64 = scmp.ne.s32.totalorder %s52, %s53
      %p65 = scmp.eq.s32.totalorder %s22, 1
      %p66 = por %p64, %p65
      %p68 = scmp.ne.s32.totalorder %s53, %s67
      %p69 = scmp.eq.s32.totalorder %s22, 0
      %p70 = por %p68, %p69
      %s72 = sadd.s32 %s71, 1
      %p75 = scmp.eq.s32.totalorder %s16, 1
      %p76 = scmp.ne.s32.totalorder %s71, %s73
      %p77 = scmp.eq.s32.totalorder %s16, 0
      %p78 = por %p76, %p77
      %p79 = scmp.ne.s32.totalorder %s71, %s73
      %p80 = scmp.eq.s32.totalorder %s21, 1
      %p81 = por %p79, %p80
      %p82 = scmp.ne.s32.totalorder %s73, %s74
      %p83 = scmp.eq.s32.totalorder %s21, 0
      %p84 = por %p82, %p83
      %p85 = scmp.ne.s32.totalorder %s73, %s74
      %p86 = scmp.eq.s32.totalorder %s22, 1
      %p87 = por %p85, %p86
      %p89 = scmp.ne.s32.totalorder %s74, %s88
      %p90 = scmp.eq.s32.totalorder %s22, 0
      %p91 = por %p89, %p90
      %s92 = ssub.s32 %s16, %s23
      %p93 = scmp.eq.s32.totalorder %s92, 0
      %s95 = sadd.s32 %s94, 1
      %s96 = scalar_select %p93, %s94, %s95
      %p99 = pneg %p93
      %p100 = scmp.eq.s32.totalorder %s16, 1
      %p101 = por %p99, %p100
      %p102 = scmp.ne.s32.totalorder %s94, %s97
      %p103 = scmp.eq.s32.totalorder %s16, 0
      %p104 = por %p102, %p103
      %p105 = scmp.ne.s32.totalorder %s94, %s97
      %p106 = scmp.eq.s32.totalorder %s21, 1
      %p107 = por %p105, %p106
      %p108 = scmp.ne.s32.totalorder %s97, %s98
      %p109 = scmp.eq.s32.totalorder %s21, 0
      %p110 = por %p108, %p109
      %p111 = scmp.ne.s32.totalorder %s97, %s98
      %p112 = scmp.eq.s32.totalorder %s22, 1
      %p113 = por %p111, %p112
      %p115 = scmp.ne.s32.totalorder %s98, %s114
      %p116 = scmp.eq.s32.totalorder %s22, 0
      %p117 = por %p115, %p116
      %p118 = scmp.le.s32.totalorder 1, %s16
      %p119 = scmp.lt.s32.totalorder %s16, 3
      %p120 = pnand %p118, %p119
      %p121 = pneg %p120
      // Predicated region
      $region9: #{tpu_custom_call.1} parent=5 // pred_check
        _
      $region10: #{tpu_custom_call.1} parent=5 // pred_check_branch
        %123 = sbr.rel (%p120) target = $region12
      $region11: #{tpu_custom_call.1} parent=5 // pred_region
        %s124 = ssub.s32 %s16, 1
        // Predicated region
        $region13: #{tpu_custom_call.1} parent=11 // pred_check
          %p125 = pneg %p63
        $region14: #{tpu_custom_call.1} parent=11 // pred_check_branch
          %127 = sbr.rel (%p125) target = $region16
        $region15: #{tpu_custom_call.1} parent=11 // pred_region
          %s129 = ssub.s32 1024, 1024
          %130 = vsyncadd [#allocation6], %s129
          %s131 = sshll.u32 [#allocation5], 4
          %s132 = int_to_ptr.vmem [resolvable:$true] %s131
          %137 = dma.hbm_to_vmem [thread:$0]  %s1, 1024, %s132, [#allocation6], 64, 64, 4
        $region16: #{tpu_custom_call.1} parent=11 // pred_fallthru
          _
        // Predicated region
        $region17: #{tpu_custom_call.1} parent=11 // pred_check
          %p138 = pneg %p84
        $region18: #{tpu_custom_call.1} parent=11 // pred_check_branch
          %140 = sbr.rel (%p138) target = $region20
        $region19: #{tpu_custom_call.1} parent=11 // pred_region
          _
        $region20: #{tpu_custom_call.1} parent=11 // pred_fallthru
          _
      $region12: #{tpu_custom_call.1} parent=5 // pred_fallthru
        _
      %p141 = scmp.lt.s32.totalorder %s16, 2
      // Predicated region
      $region21: #{tpu_custom_call.1} parent=5 // pred_check
        %p142 = pneg %p141
      $region22: #{tpu_custom_call.1} parent=5 // pred_check_branch
        %144 = sbr.rel (%p142) target = $region24
      $region23: #{tpu_custom_call.1} parent=5 // pred_region
        // Predicated region
        $region25: #{tpu_custom_call.1} parent=23 // pred_check
          %p145 = pneg %p36
        $region26: #{tpu_custom_call.1} parent=23 // pred_check_branch
          %147 = sbr.rel (%p145) target = $region28
        $region27: #{tpu_custom_call.1} parent=23 // pred_region
          %s148 = sand.u32 %s26, 1
          %s149 = scalar_lea.sflag [#allocation3], %s148
          %s150 = sand.u32 %s26, 1
          %s151 = smul.addr %s150, 8
          %s152 = scalar_lea.vmem [#allocation2], %s151
          %s153 = smul.u32 2, %s16
          %s155 = ssub.s32 128, 128
          %156 = vsyncadd %s149, %s155
          %s157 = smul.addr %s153, 64
          %s158 = scalar_lea.hbm %s0, %s157
          %s159 = sshll.u32 %s152, 4
          %s160 = int_to_ptr.vmem [resolvable:$true] %s159
          %165 = dma.hbm_to_vmem [thread:$0]  %s158, 128, %s160, %s149, 64, 64, 4
        $region28: #{tpu_custom_call.1} parent=23 // pred_fallthru
          _
      $region24: #{tpu_custom_call.1} parent=5 // pred_fallthru
        _
      %p166 = scmp.le.s32.totalorder 1, %s16
      %p167 = scmp.lt.s32.totalorder %s16, 3
      %p168 = pnand %p166, %p167
      %p169 = pneg %p168
      // Predicated region
      $region29: #{tpu_custom_call.1} parent=5 // pred_check
        _
      $region30: #{tpu_custom_call.1} parent=5 // pred_check_branch
        %171 = sbr.rel (%p168) target = $region32
      $region31: #{tpu_custom_call.1} parent=5 // pred_region
        %s172 = ssub.s32 %s16, 1
        %s173 = sand.u32 %s29, 1
        %s174 = scalar_lea.sflag [#allocation3], %s173
        %s175 = sand.u32 %s29, 1
        %s176 = smul.addr %s175, 8
        %s177 = scalar_lea.vmem [#allocation2], %s176
        // Predicated region
        $region33: #{tpu_custom_call.1} parent=31 // pred_check
          %p178 = pneg %p42
        $region34: #{tpu_custom_call.1} parent=31 // pred_check_branch
          %180 = sbr.rel (%p178) target = $region36
        $region35: #{tpu_custom_call.1} parent=31 // pred_region
          %181 = dma.done %s174, 128
        $region36: #{tpu_custom_call.1} parent=31 // pred_fallthru
          _
        // Predicated region
        $region37: #{tpu_custom_call.1} parent=31 // pred_check
          %p182 = pneg %p63
        $region38: #{tpu_custom_call.1} parent=31 // pred_check_branch
          %184 = sbr.rel (%p182) target = $region40
        $region39: #{tpu_custom_call.1} parent=31 // pred_region
          %185 = dma.done [#allocation6], 1024
        $region40: #{tpu_custom_call.1} parent=31 // pred_fallthru
          _
        %s186 = sand.u32 %s29, 1
        %s187 = scalar_lea.sflag [#allocation3], %s186
        %s188 = sand.u32 %s29, 1
        %s189 = smul.addr %s188, 8
        %s190 = scalar_lea.vmem [#allocation2], %s189
        %p191 = pneg %p42
        %p192 = pneg %p39
        %p193 = pneg %p63
        %p194 = pneg %p60
        %p195 = pneg %p84
        %p196 = pneg %p81
        %p197 = pneg %p110
        %p198 = pneg %p107
        %s199 = sand.u32 %s97, 1
        %s200 = scalar_lea.sflag [#allocation4], %s199
        %s201 = sand.u32 %s97, 1
        %s202 = smul.addr %s201, 16
        %s203 = scalar_lea.vmem [#allocation7], %s202
        %s204 = smul.u32 2, %s21
        %s205 = smul.u32 2, %s21
        %v207 = vld [vmem:[%s177] sm:$0xf]
        %v208 = vld [vmem:[%s177 + $0x4] sm:$0xf]
        %v209 = vld [vmem:[#allocation5] sm:$0xf]
        %v210 = vld [vmem:[#allocation5 + $0x4] sm:$0xf]
        %v211 = vld [vmem:[#allocation5 + $0x8] sm:$0xf]
        %v212 = vld [vmem:[#allocation5 + $0xc] sm:$0xf]
        %v213 = vld [vmem:[#allocation5 + $0x10] sm:$0xf]
        %v214 = vld [vmem:[#allocation5 + $0x14] sm:$0xf]
        %v215 = vld [vmem:[#allocation5 + $0x18] sm:$0xf]
        %v216 = vld [vmem:[#allocation5 + $0x1c] sm:$0xf]
        %v217 = vld [vmem:[#allocation5 + $0x20] sm:$0xf]
        %v218 = vld [vmem:[#allocation5 + $0x24] sm:$0xf]
        %v219 = vld [vmem:[#allocation5 + $0x28] sm:$0xf]
        %v220 = vld [vmem:[#allocation5 + $0x2c] sm:$0xf]
        %v221 = vld [vmem:[#allocation5 + $0x30] sm:$0xf]
        %v222 = vld [vmem:[#allocation5 + $0x34] sm:$0xf]
        %v223 = vld [vmem:[#allocation5 + $0x38] sm:$0xf]
        %v224 = vld [vmem:[#allocation5 + $0x3c] sm:$0xf]
        %v225 = vld [vmem:[%s2] sm:$0x1]
        %v227 = vlaneseq
        %v228 = vshrl.u32 %v227, 7
        %v229 = vsub.s32 0, %v228
        %v230 = vrot.slane %v225, %v229
        %v234 = vunpack.c.l.b16 %v207
        %v235 = vunpack.c.l.b16 %v208
        %v236 = vpack.c.b16 %v235, %v234
        %v254 = vunpack.c.l.b16 %v209
        %v255 = vunpack.c.l.b16 %v210
        %v256 = vunpack.c.l.b16 %v211
        %v257 = vunpack.c.l.b16 %v212
        %v258 = vunpack.c.l.b16 %v213
        %v259 = vunpack.c.l.b16 %v214
        %v260 = vunpack.c.l.b16 %v215
        %v261 = vunpack.c.l.b16 %v216
        %v262 = vunpack.c.l.b16 %v217
        %v263 = vunpack.c.l.b16 %v218
        %v264 = vunpack.c.l.b16 %v219
        %v265 = vunpack.c.l.b16 %v220
        %v266 = vunpack.c.l.b16 %v221
        %v267 = vunpack.c.l.b16 %v222
        %v268 = vunpack.c.l.b16 %v223
        %v269 = vunpack.c.l.b16 %v224
        %v270 = vpack.c.b16 %v255, %v254
        %v271 = vpack.c.b16 %v257, %v256
        %v272 = vpack.c.b16 %v259, %v258
        %v273 = vpack.c.b16 %v261, %v260
        %v274 = vpack.c.b16 %v263, %v262
        %v275 = vpack.c.b16 %v265, %v264
        %v276 = vpack.c.b16 %v267, %v266
        %v277 = vpack.c.b16 %v269, %v268
        %286 = vmatprep.subr.bf16.mxu0 0
        %287 = vmatpush1.bf16.msra.mxu0 %v270
        %288 = vmatprep.subr.bf16.mxu0 0
        %289 = vmatpush1.bf16.msra.mxu0 %v271
        %290 = vmatprep.subr.bf16.mxu0 0
        %291 = vmatpush1.bf16.msra.mxu0 %v272
        %292 = vmatprep.subr.bf16.mxu0 0
        %293 = vmatpush1.bf16.msra.mxu0 %v273
        %294 = vmatprep.subr.bf16.mxu0 0
        %295 = vmatpush1.bf16.msra.mxu0 %v274
        %296 = vmatprep.subr.bf16.mxu0 0
        %297 = vmatpush1.bf16.msra.mxu0 %v275
        %298 = vmatprep.subr.bf16.mxu0 0
        %299 = vmatpush1.bf16.msra.mxu0 %v276
        %300 = vmatprep.subr.bf16.mxu0 0
        %301 = vmatpush1.bf16.msra.mxu0 %v277
        %302 = vmatprep.subr.bf16.mxu0 0
        %303 = vmatpush1.bf16.msra.mxu0 0
        %304 = vmatprep.subr.bf16.mxu0 0
        %305 = vmatpush1.bf16.msra.mxu0 0
        %306 = vmatprep.subr.bf16.mxu0 0
        %307 = vmatpush1.bf16.msra.mxu0 0
        %308 = vmatprep.subr.bf16.mxu0 0
        %309 = vmatpush1.bf16.msra.mxu0 0
        %310 = vmatprep.subr.bf16.mxu0 0
        %311 = vmatpush1.bf16.msra.mxu0 0
        %312 = vmatprep.subr.bf16.mxu0 0
        %313 = vmatpush1.bf16.msra.mxu0 0
        %314 = vmatprep.subr.bf16.mxu0 0
        %315 = vmatpush1.bf16.msra.mxu0 0
        %316 = vmatprep.subr.bf16.mxu0 0
        %317 = vmatpush1.bf16.msra.mxu0 0
        %318 = vmatprep.mubr.bf16.mxu0 0
        %319 = vmatmul.mubr.bf16.gmra.mrb[0].mxu0 %v236
        %v320 = vpop.f32.mrb[0].mxu0
        %v321 = vadd.f32 %v230, %v320
        %v322 = vpop.f32.mrb[0].mxu0
        %v323 = vpop.f32.mrb[0].mxu0
        %v324 = vadd.f32 %v230, %v323
        %v325 = vpop.f32.mrb[0].mxu0
        %326 = vdwg.mxu0
        %327 = vst [vmem:[%s203] sm:$0xff] %v321
        %328 = vst [vmem:[%s203 + $0x8] sm:$0xff] %v324
        %s329 = sand.u32 %s97, 1
        %s330 = scalar_lea.sflag [#allocation4], %s329
        %s331 = sand.u32 %s97, 1
        %s332 = smul.addr %s331, 16
        %s333 = scalar_lea.vmem [#allocation7], %s332
        // Predicated region
        $region41: #{tpu_custom_call.1} parent=31 // pred_check
          %p334 = pneg %p107
        $region42: #{tpu_custom_call.1} parent=31 // pred_check_branch
          %336 = sbr.rel (%p334) target = $region44
        $region43: #{tpu_custom_call.1} parent=31 // pred_region
          %s337 = smul.u32 2, %s21
          %s339 = ssub.s32 256, 256
          %340 = vsyncadd %s330, %s339
          %s341 = smul.addr %s337, 128
          %s342 = scalar_lea.hbm %s3, %s341
          %s343 = sshll.u32 %s333, 4
          %s344 = int_to_ptr.vmem [resolvable:$true] %s343
          %349 = dma.vmem_to_hbm [thread:$0]  %s344, 256, %s342, %s330, 128, 128, 8
        $region44: #{tpu_custom_call.1} parent=31 // pred_fallthru
          _
      $region32: #{tpu_custom_call.1} parent=5 // pred_fallthru
        _
      %p350 = scmp.le.s32.totalorder 2, %s16
      // Predicated region
      $region45: #{tpu_custom_call.1} parent=5 // pred_check
        %p351 = pneg %p350
      $region46: #{tpu_custom_call.1} parent=5 // pred_check_branch
        %353 = sbr.rel (%p351) target = $region48
      $region47: #{tpu_custom_call.1} parent=5 // pred_region
        %s354 = ssub.s32 %s16, 2
        // Predicated region
        $region49: #{tpu_custom_call.1} parent=47 // pred_check
          %p355 = pneg %p113
        $region50: #{tpu_custom_call.1} parent=47 // pred_check_branch
          %357 = sbr.rel (%p355) target = $region52
        $region51: #{tpu_custom_call.1} parent=47 // pred_region
          %s358 = sand.u32 %s98, 1
          %s359 = scalar_lea.sflag [#allocation4], %s358
          %s360 = sand.u32 %s98, 1
          %s361 = smul.addr %s360, 16
          %s362 = scalar_lea.vmem [#allocation7], %s361
          %363 = dma.done %s359, 256
        $region52: #{tpu_custom_call.1} parent=47 // pred_fallthru
          _
      $region48: #{tpu_custom_call.1} parent=5 // pred_fallthru
        _
    $region6: #{tpu_custom_call.1} parent=1 // loop_footer
      %s20 = sadd.s32 1, %s16
    $region7: #{tpu_custom_call.1} parent=1 // loop_footer_branch
      %15 = sbr.rel target = $region3
    $region8: #{tpu_custom_call.1} parent=1 // loop_exit
      _
    %364 = vsyncpa [#allocation3], 1
    %s365 = scalar_lea.sflag [#allocation3], 1
    %366 = vsyncpa %s365, 1
    %367 = vsyncpa [#allocation6], 1
    %368 = vsyncpa [#allocation4], 1
    %s369 = scalar_lea.sflag [#allocation4], 1
    %370 = vsyncpa %s369, 1

</llo_original>
